<compile_context>
chip_gen: v5e
topology: v5e:2x2
jax: 0.10.0
libtpu: 0.0.40
codegen_flags: <defaults>
</compile_context>

<pallas_src>
import jax
import jax.numpy as jnp
from jax.experimental import pallas as pl
from jax.experimental.pallas import tpu as pltpu

_MIB = 1024 * 1024


def _vmem_limit_bytes():
    """Generation-aware scoped-VMEM limit (~48 MiB on v7x, ~64 MiB on v5e/v6e)."""
    cap = None
    try:
        cap = getattr(pltpu.get_tpu_info(), "vmem_capacity_bytes", None)
    except Exception:
        cap = None
    if not cap:
        cap = 64 * _MIB  # conservative default: v7x has 64 MiB per TensorCore
    return int(min(64 * _MIB, (cap * 3) // 4))


# ---------------------------------------------------------------------------
# Path A: fully fused single pass (pool + MLP + rescale), one read + one write
# ---------------------------------------------------------------------------
def _fused_kernel(x_ref, w1t_ref, b1_ref, w2t_ref, b2_ref, out_ref):
    # x_ref/out_ref: (1, c, hw).  w1t: (c_red, c) with 1/hw pre-folded,
    # b1: (c_red, 1), w2t: (c, c_red), b2: (c, 1) -- all f32, c on natural axes
    # so no lane<->sublane relayout is needed anywhere.
    x = x_ref[0]                                                      # (c, hw)
    pooled = jnp.sum(x, axis=-1, keepdims=True, dtype=jnp.float32)    # (c, 1)
    h = jnp.maximum(
        jnp.dot(w1t_ref[...], pooled, preferred_element_type=jnp.float32)
        + b1_ref[...],
        0.0,
    )                                                                 # (c_red, 1)
    z = jnp.dot(w2t_ref[...], h, preferred_element_type=jnp.float32) + b2_ref[...]
    gate = 1.0 / (1.0 + jnp.exp(-z))                                  # sigmoid, (c, 1)
    out_ref[0] = x * gate.astype(x.dtype)                             # lane broadcast


# ---------------------------------------------------------------------------
# Path B/C pass 1: per-(batch, spatial-tile) partial spatial sums (f32)
# ---------------------------------------------------------------------------
def _make_pool_kernel(hw, hw_tile, mask_tail):
    def pool_kernel(x_ref, psum_ref):
        # x_ref: (1, c_tile, hw_tile);  psum_ref: (1, 1, c_tile, 1) f32
        x = x_ref[0]                                                  # (c_tile, hw_tile)
        if mask_tail:
            # Ragged last spatial tile: OOB lanes hold garbage -> zero them.
            j = pl.program_id(2)
            col = jax.lax.broadcasted_iota(jnp.int32, x.shape, 1) + j * hw_tile
            x = jnp.where(col < hw, x, jnp.zeros_like(x))
        psum_ref[0, 0] = jnp.sum(x, axis=-1, keepdims=True, dtype=jnp.float32)

    return pool_kernel


# ---------------------------------------------------------------------------
# Path B/C pass 2: channel-wise rescale in the input dtype
# ---------------------------------------------------------------------------
def _scale_kernel(x_ref, gate_ref, out_ref):
    # x_ref/out_ref: (1, c_tile, hw_tile);  gate_ref: (1, c_tile, 1) in x dtype
    out_ref[...] = x_ref[...] * gate_ref[...]


def se_layer(x, w1, b1, w2, b2, *, force_two_pass=False, block_budget=None):
    """SE forward.  x: (b, c, h, w) NCHW.
    w1: (c, c_red), b1: (c_red,), w2: (c_red, c), b2: (c,)  (Linear as in,out)."""
    b, c, H, W = x.shape
    hw = H * W
    itemsize = jnp.dtype(x.dtype).itemsize
    x3 = x.reshape(b, c, hw)

    vmem_limit = _vmem_limit_bytes()
    if block_budget is None:
        block_budget = max(_MIB, vmem_limit // 8)

    f32 = jnp.float32
    w1f, b1f, w2f, b2f = (a.astype(f32) for a in (w1, b1, w2, b2))
    c_red = w1f.shape[1]

    # ---- Path A: fused single pass -----------------------------------------
    # VMEM need (per slab): double-buffered in+out (4x) + f32 reduce temp (+4B/elt)
    # + headroom for the product before the store (+1x).
    fused_bytes = c * hw * (5 * itemsize + 4)
    if not force_two_pass and fused_bytes <= vmem_limit - _MIB:
        w1t = (w1f / float(hw)).T          # (c_red, c), 1/hw folded into W1
        w2t = w2f.T                        # (c, c_red)
        b1c = b1f.reshape(c_red, 1)
        b2c = b2f.reshape(c, 1)
        out3 = pl.pallas_call(
            _fused_kernel,
            out_shape=jax.ShapeDtypeStruct((b, c, hw), x.dtype),
            grid=(b,),
            in_specs=[
                pl.BlockSpec((1, c, hw), lambda i: (i, 0, 0)),
                pl.BlockSpec((c_red, c), lambda i: (0, 0)),
                pl.BlockSpec((c_red, 1), lambda i: (0, 0)),
                pl.BlockSpec((c, c_red), lambda i: (0, 0)),
                pl.BlockSpec((c, 1), lambda i: (0, 0)),
            ],
            out_specs=pl.BlockSpec((1, c, hw), lambda i: (i, 0, 0)),
            compiler_params=pltpu.CompilerParams(
                dimension_semantics=("parallel",),
                vmem_limit_bytes=vmem_limit,
            ),
        )(x3, w1t, b1c, w2t, b2c)
        return out3.reshape(b, c, H, W)

    # ---- Path B/C: two memory-bound passes ----------------------------------
    # Prefer channel tiling with the full hw on lanes: contiguous DMAs,
    # lane-dense stores, no masking.  Fall back to lane-aligned spatial tiling
    # (masked ragged tail) only when an 8-row slab exceeds the block budget.
    row_bytes = hw * itemsize
    if 8 * row_bytes <= block_budget:
        hw_tile = hw
        c_tile = min(c, max(8, (block_budget // row_bytes) // 8 * 8))
    else:
        c_tile = min(c, max(8, (block_budget // (128 * itemsize)) // 8 * 8))
        hw_tile = max(128, (block_budget // (c_tile * itemsize)) // 128 * 128)
    n_c = pl.cdiv(c, c_tile)
    n_hw = pl.cdiv(hw, hw_tile)
    mask_tail = (hw % hw_tile) != 0

    cparams = pltpu.CompilerParams(
        dimension_semantics=("parallel", "parallel", "parallel"),
        vmem_limit_bytes=vmem_limit,
    )

    # pass 1: partial sums -- no padding of x, no resident accumulator (all
    # grid axes parallel; on v7x both TensorCores help even at b == 1).
    partial = pl.pallas_call(
        _make_pool_kernel(hw, hw_tile, mask_tail),
        out_shape=jax.ShapeDtypeStruct((b, n_hw, c, 1), jnp.float32),
        grid=(b, n_c, n_hw),
        in_specs=[pl.BlockSpec((1, c_tile, hw_tile), lambda i, k, j: (i, k, j))],
        out_specs=pl.BlockSpec((1, 1, c_tile, 1), lambda i, k, j: (i, j, k, 0)),
        compiler_params=cparams,
    )(x3)

    pooled = jnp.sum(partial[..., 0], axis=1) * (1.0 / hw)           # (b, c) f32

    # tiny excitation MLP in plain JAX (negligible FLOPs, bad MXU shape)
    hmid = jnp.maximum(pooled @ w1f + b1f, 0.0)
    gate = jax.nn.sigmoid(hmid @ w2f + b2f).astype(x.dtype).reshape(b, c, 1)

    # pass 2: rescale.  Ragged tails need no mask: OOB stores are dropped.
    # (input_output_aliases={0: 0} would halve peak HBM footprint when x is
    #  donatable, but risks an XLA-inserted copy otherwise; intentionally off.)
    out3 = pl.pallas_call(
        _scale_kernel,
        out_shape=jax.ShapeDtypeStruct((b, c, hw), x.dtype),
        grid=(b, n_c, n_hw),
        in_specs=[
            pl.BlockSpec((1, c_tile, hw_tile), lambda i, k, j: (i, k, j)),
            pl.BlockSpec((1, c_tile, 1), lambda i, k, j: (i, k, 0)),
        ],
        out_specs=pl.BlockSpec((1, c_tile, hw_tile), lambda i, k, j: (i, k, j)),
        compiler_params=cparams,
    )(x3, gate)

    return out3.reshape(b, c, H, W)


def se_layer_ref(x, w1, b1, w2, b2):
    """Pure-JAX reference for verification."""
    pooled = jnp.mean(x.astype(jnp.float32), axis=(2, 3))            # (b, c)
    h = jnp.maximum(pooled @ w1.astype(jnp.float32) + b1.astype(jnp.float32), 0.0)
    y = jax.nn.sigmoid(h @ w2.astype(jnp.float32) + b2.astype(jnp.float32))
    return (x * y.astype(x.dtype)[:, :, None, None]).astype(x.dtype)


if __name__ == "__main__":
    key = jax.random.PRNGKey(0)
    reduction = 16

    def make_params(k, c):
        c_red = max(1, c // reduction)
        k1, kb1, k2, kb2 = jax.random.split(k, 4)
        bound1 = 1.0 / (c ** 0.5)
        w1 = jax.random.uniform(k1, (c, c_red), jnp.float32, -bound1, bound1)
        b1 = jax.random.uniform(kb1, (c_red,), jnp.float32, -bound1, bound1)
        bound2 = 1.0 / (c_red ** 0.5)
        w2 = jax.random.uniform(k2, (c_red, c), jnp.float32, -bound2, bound2)
        b2 = jax.random.uniform(kb2, (c,), jnp.float32, -bound2, bound2)
        return w1, b1, w2, b2

    kx1, kp1, kx2 = jax.random.split(key, 3)

    # 1) fused single-pass path (default for small/medium slabs)
    b, c, H, W = 2, 32, 16, 16
    w1, b1, w2, b2 = make_params(kp1, c)
    x = jax.random.normal(kx1, (b, c, H, W), dtype=jnp.float32)
    out = jax.block_until_ready(se_layer(x, w1, b1, w2, b2))
    ref = se_layer_ref(x, w1, b1, w2, b2)
    assert out.shape == (b, c, H, W)
    assert jnp.allclose(out, ref, atol=1e-3, rtol=1e-3), "fused path mismatch"

    # 2) two-pass, channel-tiled (contiguous DMA) fallback
    out2 = jax.block_until_ready(
        se_layer(x, w1, b1, w2, b2, force_two_pass=True, block_budget=16 * 1024)
    )
    assert jnp.allclose(out2, ref, atol=1e-3, rtol=1e-3), "channel-tiled path mismatch"

    # 3) two-pass, spatial-tiled fallback with a ragged (masked) last tile
    xs = jax.random.normal(kx2, (2, 32, 13, 13), dtype=jnp.float32)
    outs = jax.block_until_ready(
        se_layer(xs, w1, b1, w2, b2, force_two_pass=True, block_budget=4096)
    )
    refs = se_layer_ref(xs, w1, b1, w2, b2)
    assert jnp.allclose(outs, refs, atol=1e-3, rtol=1e-3), "spatial-tiled path mismatch"

    print("KERNEL_OK")
</pallas_src>

<mosaic_0001>
module attributes {stable_mosaic.version = 11 : i64} {
  func.func @_fused_kernel(%arg0: i32, %arg1: memref<1x32x256xf32, #tpu.memory_space<vmem>>, %arg2: memref<2x32xf32, #tpu.memory_space<vmem>>, %arg3: memref<2x1xf32, #tpu.memory_space<vmem>>, %arg4: memref<32x2xf32, #tpu.memory_space<vmem>>, %arg5: memref<32x1xf32, #tpu.memory_space<vmem>>, %arg6: memref<1x32x256xf32, #tpu.memory_space<vmem>>) attributes {dimension_semantics = [#tpu.dimension_semantics<parallel>], iteration_bounds = array<i64: 2>, scalar_prefetch = 0 : i64, scratch_operands = 0 : i64, tpu.core_type = #tpu.core_type<tc>, window_params = [{transform_indices = @transform_0, window_bounds = array<i64: 1, 32, 256>}, {pipeline_mode = #tpu.pipeline_mode<synchronous>, transform_indices = @transform_1, window_bounds = array<i64: 2, 32>}, {pipeline_mode = #tpu.pipeline_mode<synchronous>, transform_indices = @transform_2, window_bounds = array<i64: 2, 1>}, {pipeline_mode = #tpu.pipeline_mode<synchronous>, transform_indices = @transform_3, window_bounds = array<i64: 32, 2>}, {pipeline_mode = #tpu.pipeline_mode<synchronous>, transform_indices = @transform_4, window_bounds = array<i64: 32, 1>}, {transform_indices = @transform_5, window_bounds = array<i64: 1, 32, 256>}]} {
    %c0 = arith.constant 0 : index
    %c0_0 = arith.constant 0 : index
    %c0_1 = arith.constant 0 : index
    %0 = vector.load %arg1[%c0, %c0_0, %c0_1] : memref<1x32x256xf32, #tpu.memory_space<vmem>>, vector<1x32x256xf32>
    %1 = vector.shape_cast %0 : vector<1x32x256xf32> to vector<32x256xf32>
    %cst = arith.constant dense<0.000000e+00> : vector<32xf32>
    %2 = vector.multi_reduction <add>, %1, %cst [1] : vector<32x256xf32> to vector<32xf32>
    %3 = vector.shape_cast %2 : vector<32xf32> to vector<32x1xf32>
    %c0_2 = arith.constant 0 : index
    %c0_3 = arith.constant 0 : index
    %4 = vector.load %arg2[%c0_2, %c0_3] : memref<2x32xf32, #tpu.memory_space<vmem>>, vector<2x32xf32>
    %cst_4 = arith.constant dense<0.000000e+00> : vector<2x1xf32>
    %5 = tpu.matmul %4, %3, %cst_4 {dimension_numbers = #tpu.dot_dimension_numbers<[1], [0], [0], [1], [0, 0, 1, 1], [], []>} : vector<2x32xf32>, vector<32x1xf32>, vector<2x1xf32> -> vector<2x1xf32>
    %c0_5 = arith.constant 0 : index
    %c0_6 = arith.constant 0 : index
    %6 = vector.load %arg3[%c0_5, %c0_6] : memref<2x1xf32, #tpu.memory_space<vmem>>, vector<2x1xf32>
    %7 = arith.addf %5, %6 : vector<2x1xf32>
    %cst_7 = arith.constant 0.000000e+00 : f32
    %8 = vector.broadcast %cst_7 : f32 to vector<2x1xf32>
    %9 = arith.maximumf %7, %8 : vector<2x1xf32>
    %c0_8 = arith.constant 0 : index
    %c0_9 = arith.constant 0 : index
    %10 = vector.load %arg4[%c0_8, %c0_9] : memref<32x2xf32, #tpu.memory_space<vmem>>, vector<32x2xf32>
    %cst_10 = arith.constant dense<0.000000e+00> : vector<32x1xf32>
    %11 = tpu.matmul %10, %9, %cst_10 {dimension_numbers = #tpu.dot_dimension_numbers<[1], [0], [0], [1], [0, 0, 1, 1], [], []>} : vector<32x2xf32>, vector<2x1xf32>, vector<32x1xf32> -> vector<32x1xf32>
    %c0_11 = arith.constant 0 : index
    %c0_12 = arith.constant 0 : index
    %12 = vector.load %arg5[%c0_11, %c0_12] : memref<32x1xf32, #tpu.memory_space<vmem>>, vector<32x1xf32>
    %13 = arith.addf %11, %12 : vector<32x1xf32>
    %cst_13 = arith.constant 0.000000e+00 : f32
    %14 = vector.broadcast %cst_13 : f32 to vector<32x1xf32>
    %15 = arith.subf %14, %13 : vector<32x1xf32>
    %16 = math.exp %15 : vector<32x1xf32>
    %cst_14 = arith.constant 1.000000e+00 : f32
    %17 = vector.broadcast %cst_14 : f32 to vector<32x1xf32>
    %18 = arith.addf %17, %16 : vector<32x1xf32>
    %cst_15 = arith.constant 1.000000e+00 : f32
    %19 = vector.broadcast %cst_15 : f32 to vector<32x1xf32>
    %20 = arith.divf %19, %18 : vector<32x1xf32>
    %21 = vector.broadcast %20 : vector<32x1xf32> to vector<32x256xf32>
    %22 = arith.mulf %1, %21 : vector<32x256xf32>
    %c0_16 = arith.constant 0 : index
    %c0_17 = arith.constant 0 : index
    %c0_18 = arith.constant 0 : index
    %23 = vector.load %arg6[%c0_16, %c0_17, %c0_18] : memref<1x32x256xf32, #tpu.memory_space<vmem>>, vector<1x32x256xf32>
    %24 = vector.shape_cast %23 : vector<1x32x256xf32> to vector<32x256xf32>
    %25 = vector.shape_cast %22 : vector<32x256xf32> to vector<1x32x256xf32>
    tpu.vector_store %arg6[%c0_16, %c0_17, %c0_18], %25 {strides = array<i32>} : memref<1x32x256xf32, #tpu.memory_space<vmem>>, vector<1x32x256xf32>,
    return
  }
  func.func @transform_0(%arg0: i32) -> (i32, i32, i32) {
    %c0_i32 = arith.constant 0 : i32
    %c0_i32_0 = arith.constant 0 : i32
    %c0_i32_1 = arith.constant 0 : i32
    return %arg0, %c0_i32, %c0_i32_0 : i32, i32, i32
  }
  func.func @transform_1(%arg0: i32) -> (i32, i32) {
    %c0_i32 = arith.constant 0 : i32
    %c0_i32_0 = arith.constant 0 : i32
    %c0_i32_1 = arith.constant 0 : i32
    return %c0_i32, %c0_i32_0 : i32, i32
  }
  func.func @transform_2(%arg0: i32) -> (i32, i32) {
    %c0_i32 = arith.constant 0 : i32
    %c0_i32_0 = arith.constant 0 : i32
    %c0_i32_1 = arith.constant 0 : i32
    return %c0_i32, %c0_i32_0 : i32, i32
  }
  func.func @transform_3(%arg0: i32) -> (i32, i32) {
    %c0_i32 = arith.constant 0 : i32
    %c0_i32_0 = arith.constant 0 : i32
    %c0_i32_1 = arith.constant 0 : i32
    return %c0_i32, %c0_i32_0 : i32, i32
  }
  func.func @transform_4(%arg0: i32) -> (i32, i32) {
    %c0_i32 = arith.constant 0 : i32
    %c0_i32_0 = arith.constant 0 : i32
    %c0_i32_1 = arith.constant 0 : i32
    return %c0_i32, %c0_i32_0 : i32, i32
  }
  func.func @transform_5(%arg0: i32) -> (i32, i32, i32) {
    %c0_i32 = arith.constant 0 : i32
    %c0_i32_0 = arith.constant 0 : i32
    %c0_i32_1 = arith.constant 0 : i32
    return %arg0, %c0_i32, %c0_i32_0 : i32, i32, i32
  }
}

</mosaic_0001>

<llo_original>
// kernel: tpu_custom_call.1
$region0: #{tpu_custom_call.1}
  #allocation0 [shape = 'u32[]', space=smem, size = 0x4, offset = 0x4, fixed_abs, tag = 'smem constant byte address 0x4 - core index']
  #allocation1 [shape = 'u32[72,128]{1,0:T(1,128)}', space=vmem, size = 0x9000, scoped, tag = 'internal scratch']
  %s0 = inlined_call_operand.hbm [shape: f32[2,32,256], index: 0, kind: input, shape index: {}]
  %s1 = inlined_call_operand.vmem [shape: f32[2,32], index: 1, kind: input, shape index: {}]
  %s2 = inlined_call_operand.vmem [shape: f32[2,1], index: 2, kind: input, shape index: {}]
  %s3 = inlined_call_operand.vmem [shape: f32[32,2], index: 3, kind: input, shape index: {}]
  %s4 = inlined_call_operand.vmem [shape: f32[32,1], index: 4, kind: input, shape index: {}]
  %s5 = inlined_call_operand.hbm [shape: f32[2,32,256], index: 5, kind: output, shape index: {}]
  %s6 = sld [smem:[#allocation0]]
  $region57: #{tpu_custom_call.1} parent=0
    _
  %s8 = ssub.s32 1, %s6
  %s9 = scalar_select 0, %s8, %s6
  $region1: #{tpu_custom_call.1} parent=0
    #allocation2 [shape = 'u8[65536]{0}', space=vmem, size = 0x10000, scoped, tag = 'input window, operand 0']
    #allocation3 [shape = 's32[2]{0}', space=sflag, size = 0x8, scoped, tag = 'scoped memory for tpu_custom_call.1']
    #allocation4 [shape = 's32[2]{0}', space=sflag, size = 0x8, scoped, tag = 'scoped memory for tpu_custom_call.1']
    #allocation5 [shape = 'u8[65536]{0}', space=vmem, size = 0x10000, scoped, tag = 'output window, operand 0']
    %10 = vsyncpa [#allocation3], 0
    %s11 = scalar_lea.sflag [#allocation3], 1
    %12 = vsyncpa %s11, 0
    %13 = vsyncpa [#allocation4], 0
    %s14 = scalar_lea.sflag [#allocation4], 1
    %15 = vsyncpa %s14, 0
    loop: start=0, step=1, limit=4
    $region2: #{tpu_custom_call.1} parent=1 // loop_pre_header
      _
    $region3: #{tpu_custom_call.1} parent=1 // loop_header
      %s17 = sphi 0, %s21
      %p18 = scmp.ge.s32.totalorder %s17, 4
      %s27 = sphi 0, %s29
      %s30 = sphi 0, %s27
      %s31 = sphi 0, %s30
      %s47 = sphi 0, %s31
      %s51 = sphi 0, %s51
      %s53 = sphi 0, %s51
      %s54 = sphi 0, %s53
      %s68 = sphi 0, %s54
      %s72 = sphi 0, %s72
      %s74 = sphi 0, %s72
      %s75 = sphi 0, %s74
      %s89 = sphi 0, %s75
      %s93 = sphi 0, %s93
      %s95 = sphi 0, %s93
      %s96 = sphi 0, %s95
      %s110 = sphi 0, %s96
      %s114 = sphi 0, %s114
      %s116 = sphi 0, %s114
      %s117 = sphi 0, %s116
      %s131 = sphi 0, %s117
      %s137 = sphi 0, %s139
      %s140 = sphi 0, %s137
      %s141 = sphi 0, %s140
      %s157 = sphi 0, %s141
    $region4: #{tpu_custom_call.1} parent=1 // loop_header_branch
      %20 = sbr.rel (%p18) target = $region8
    $region5: #{tpu_custom_call.1} parent=1 // loop_body
      %s22 = ssub.s32 %s17, 1
      %s23 = ssub.s32 %s17, 2
      %s24 = sadd.s32 %s17, 1
      %s25 = ssub.s32 %s17, %s24
      %p26 = scmp.eq.s32.totalorder %s25, 0
      %s28 = sadd.s32 %s27, 1
      %s29 = scalar_select %p26, %s27, %s28
      %p32 = pneg %p26
      %p33 = scmp.eq.s32.totalorder %s17, 1
      %p34 = por %p32, %p33
      %p35 = scmp.ne.s32.totalorder %s27, %s30
      %p36 = scmp.eq.s32.totalorder %s17, 0
      %p37 = por %p35, %p36
      %p38 = scmp.ne.s32.totalorder %s27, %s30
      %p39 = scmp.eq.s32.totalorder %s22, 1
      %p40 = por %p38, %p39
      %p41 = scmp.ne.s32.totalorder %s30, %s31
      %p42 = scmp.eq.s32.totalorder %s22, 0
      %p43 = por %p41, %p42
      %p44 = scmp.ne.s32.totalorder %s30, %s31
      %p45 = scmp.eq.s32.totalorder %s23, 1
      %p46 = por %p44, %p45
      %p48 = scmp.ne.s32.totalorder %s31, %s47
      %p49 = scmp.eq.s32.totalorder %s23, 0
      %p50 = por %p48, %p49
      %s52 = sadd.s32 %s51, 1
      %p55 = scmp.eq.s32.totalorder %s17, 1
      %p56 = scmp.ne.s32.totalorder %s51, %s53
      %p57 = scmp.eq.s32.totalorder %s17, 0
      %p58 = por %p56, %p57
      %p59 = scmp.ne.s32.totalorder %s51, %s53
      %p60 = scmp.eq.s32.totalorder %s22, 1
      %p61 = por %p59, %p60
      %p62 = scmp.ne.s32.totalorder %s53, %s54
      %p63 = scmp.eq.s32.totalorder %s22, 0
      %p64 = por %p62, %p63
      %p65 = scmp.ne.s32.totalorder %s53, %s54
      %p66 = scmp.eq.s32.totalorder %s23, 1
      %p67 = por %p65, %p66
      %p69 = scmp.ne.s32.totalorder %s54, %s68
      %p70 = scmp.eq.s32.totalorder %s23, 0
      %p71 = por %p69, %p70
      %s73 = sadd.s32 %s72, 1
      %p76 = scmp.eq.s32.totalorder %s17, 1
      %p77 = scmp.ne.s32.totalorder %s72, %s74
      %p78 = scmp.eq.s32.totalorder %s17, 0
      %p79 = por %p77, %p78
      %p80 = scmp.ne.s32.totalorder %s72, %s74
      %p81 = scmp.eq.s32.totalorder %s22, 1
      %p82 = por %p80, %p81
      %p83 = scmp.ne.s32.totalorder %s74, %s75
      %p84 = scmp.eq.s32.totalorder %s22, 0
      %p85 = por %p83, %p84
      %p86 = scmp.ne.s32.totalorder %s74, %s75
      %p87 = scmp.eq.s32.totalorder %s23, 1
      %p88 = por %p86, %p87
      %p90 = scmp.ne.s32.totalorder %s75, %s89
      %p91 = scmp.eq.s32.totalorder %s23, 0
      %p92 = por %p90, %p91
      %s94 = sadd.s32 %s93, 1
      %p97 = scmp.eq.s32.totalorder %s17, 1
      %p98 = scmp.ne.s32.totalorder %s93, %s95
      %p99 = scmp.eq.s32.totalorder %s17, 0
      %p100 = por %p98, %p99
      %p101 = scmp.ne.s32.totalorder %s93, %s95
      %p102 = scmp.eq.s32.totalorder %s22, 1
      %p103 = por %p101, %p102
      %p104 = scmp.ne.s32.totalorder %s95, %s96
      %p105 = scmp.eq.s32.totalorder %s22, 0
      %p106 = por %p104, %p105
      %p107 = scmp.ne.s32.totalorder %s95, %s96
      %p108 = scmp.eq.s32.totalorder %s23, 1
      %p109 = por %p107, %p108
      %p111 = scmp.ne.s32.totalorder %s96, %s110
      %p112 = scmp.eq.s32.totalorder %s23, 0
      %p113 = por %p111, %p112
      %s115 = sadd.s32 %s114, 1
      %p118 = scmp.eq.s32.totalorder %s17, 1
      %p119 = scmp.ne.s32.totalorder %s114, %s116
      %p120 = scmp.eq.s32.totalorder %s17, 0
      %p121 = por %p119, %p120
      %p122 = scmp.ne.s32.totalorder %s114, %s116
      %p123 = scmp.eq.s32.totalorder %s22, 1
      %p124 = por %p122, %p123
      %p125 = scmp.ne.s32.totalorder %s116, %s117
      %p126 = scmp.eq.s32.totalorder %s22, 0
      %p127 = por %p125, %p126
      %p128 = scmp.ne.s32.totalorder %s116, %s117
      %p129 = scmp.eq.s32.totalorder %s23, 1
      %p130 = por %p128, %p129
      %p132 = scmp.ne.s32.totalorder %s117, %s131
      %p133 = scmp.eq.s32.totalorder %s23, 0
      %p134 = por %p132, %p133
      %s135 = ssub.s32 %s17, %s24
      %p136 = scmp.eq.s32.totalorder %s135, 0
      %s138 = sadd.s32 %s137, 1
      %s139 = scalar_select %p136, %s137, %s138
      %p142 = pneg %p136
      %p143 = scmp.eq.s32.totalorder %s17, 1
      %p144 = por %p142, %p143
      %p145 = scmp.ne.s32.totalorder %s137, %s140
      %p146 = scmp.eq.s32.totalorder %s17, 0
      %p147 = por %p145, %p146
      %p148 = scmp.ne.s32.totalorder %s137, %s140
      %p149 = scmp.eq.s32.totalorder %s22, 1
      %p150 = por %p148, %p149
      %p151 = scmp.ne.s32.totalorder %s140, %s141
      %p152 = scmp.eq.s32.totalorder %s22, 0
      %p153 = por %p151, %p152
      %p154 = scmp.ne.s32.totalorder %s140, %s141
      %p155 = scmp.eq.s32.totalorder %s23, 1
      %p156 = por %p154, %p155
      %p158 = scmp.ne.s32.totalorder %s141, %s157
      %p159 = scmp.eq.s32.totalorder %s23, 0
      %p160 = por %p158, %p159
      %p161 = scmp.le.s32.totalorder 1, %s17
      %p162 = scmp.lt.s32.totalorder %s17, 3
      %p163 = pnand %p161, %p162
      %p164 = pneg %p163
      // Predicated region
      $region9: #{tpu_custom_call.1} parent=5 // pred_check
        _
      $region10: #{tpu_custom_call.1} parent=5 // pred_check_branch
        %166 = sbr.rel (%p163) target = $region12
      $region11: #{tpu_custom_call.1} parent=5 // pred_region
        %s167 = ssub.s32 %s17, 1
        // Predicated region
        $region13: #{tpu_custom_call.1} parent=11 // pred_check
          %p168 = pneg %p64
        $region14: #{tpu_custom_call.1} parent=11 // pred_check_branch
          %170 = sbr.rel (%p168) target = $region16
        $region15: #{tpu_custom_call.1} parent=11 // pred_region
          _
        $region16: #{tpu_custom_call.1} parent=11 // pred_fallthru
          _
        // Predicated region
        $region17: #{tpu_custom_call.1} parent=11 // pred_check
          %p171 = pneg %p85
        $region18: #{tpu_custom_call.1} parent=11 // pred_check_branch
          %173 = sbr.rel (%p171) target = $region20
        $region19: #{tpu_custom_call.1} parent=11 // pred_region
          _
        $region20: #{tpu_custom_call.1} parent=11 // pred_fallthru
          _
        // Predicated region
        $region21: #{tpu_custom_call.1} parent=11 // pred_check
          %p174 = pneg %p106
        $region22: #{tpu_custom_call.1} parent=11 // pred_check_branch
          %176 = sbr.rel (%p174) target = $region24
        $region23: #{tpu_custom_call.1} parent=11 // pred_region
          _
        $region24: #{tpu_custom_call.1} parent=11 // pred_fallthru
          _
        // Predicated region
        $region25: #{tpu_custom_call.1} parent=11 // pred_check
          %p177 = pneg %p127
        $region26: #{tpu_custom_call.1} parent=11 // pred_check_branch
          %179 = sbr.rel (%p177) target = $region28
        $region27: #{tpu_custom_call.1} parent=11 // pred_region
          _
        $region28: #{tpu_custom_call.1} parent=11 // pred_fallthru
          _
      $region12: #{tpu_custom_call.1} parent=5 // pred_fallthru
        _
      %p180 = scmp.lt.s32.totalorder %s17, 2
      // Predicated region
      $region29: #{tpu_custom_call.1} parent=5 // pred_check
        %p181 = pneg %p180
      $region30: #{tpu_custom_call.1} parent=5 // pred_check_branch
        %183 = sbr.rel (%p181) target = $region32
      $region31: #{tpu_custom_call.1} parent=5 // pred_region
        // Predicated region
        $region33: #{tpu_custom_call.1} parent=31 // pred_check
          %p184 = pneg %p37
        $region34: #{tpu_custom_call.1} parent=31 // pred_check_branch
          %186 = sbr.rel (%p184) target = $region36
        $region35: #{tpu_custom_call.1} parent=31 // pred_region
          %s187 = sand.u32 %s27, 1
          %s188 = scalar_lea.sflag [#allocation3], %s187
          %s189 = sand.u32 %s27, 1
          %s190 = smul.addr %s189, 64
          %s191 = scalar_lea.vmem [#allocation2], %s190
          %193 = vsyncadd %s188, 0
          %s194 = smul.addr %s17, 8
          %s195 = smul.addr %s194, 8
          %s196 = scalar_lea.hbm %s0, %s195
          %s197 = sshll.u32 %s196, 4
          %s198 = int_to_ptr.hbm [resolvable:$true] %s197
          %s199 = sshll.u32 %s191, 4
          %s200 = int_to_ptr.vmem [resolvable:$true] %s199
          %205 = dma.hbm_to_vmem [thread:$0]  %s198, 1024, %s200, %s188, 256, 256, 16
        $region36: #{tpu_custom_call.1} parent=31 // pred_fallthru
          _
      $region32: #{tpu_custom_call.1} parent=5 // pred_fallthru
        _
      %p206 = scmp.le.s32.totalorder 1, %s17
      %p207 = scmp.lt.s32.totalorder %s17, 3
      %p208 = pnand %p206, %p207
      %p209 = pneg %p208
      // Predicated region
      $region37: #{tpu_custom_call.1} parent=5 // pred_check
        _
      $region38: #{tpu_custom_call.1} parent=5 // pred_check_branch
        %211 = sbr.rel (%p208) target = $region40
      $region39: #{tpu_custom_call.1} parent=5 // pred_region
        %s212 = ssub.s32 %s17, 1
        %s213 = sand.u32 %s30, 1
        %s214 = scalar_lea.sflag [#allocation3], %s213
        %s215 = sand.u32 %s30, 1
        %s216 = smul.addr %s215, 64
        %s217 = scalar_lea.vmem [#allocation2], %s216
        // Predicated region
        $region41: #{tpu_custom_call.1} parent=39 // pred_check
          %p218 = pneg %p43
        $region42: #{tpu_custom_call.1} parent=39 // pred_check_branch
          %220 = sbr.rel (%p218) target = $region44
        $region43: #{tpu_custom_call.1} parent=39 // pred_region
          %222 = dma.done %s214, 1024
        $region44: #{tpu_custom_call.1} parent=39 // pred_fallthru
          _
        %s223 = sand.u32 %s30, 1
        %s224 = scalar_lea.sflag [#allocation3], %s223
        %s225 = sand.u32 %s30, 1
        %s226 = smul.addr %s225, 64
        %s227 = scalar_lea.vmem [#allocation2], %s226
        %p228 = pneg %p43
        %p229 = pneg %p40
        %p230 = pneg %p64
        %p231 = pneg %p61
        %p232 = pneg %p85
        %p233 = pneg %p82
        %p234 = pneg %p106
        %p235 = pneg %p103
        %p236 = pneg %p127
        %p237 = pneg %p124
        %p238 = pneg %p153
        %p239 = pneg %p150
        %s240 = sand.u32 %s140, 1
        %s241 = scalar_lea.sflag [#allocation4], %s240
        %s242 = sand.u32 %s140, 1
        %s243 = smul.addr %s242, 64
        %s244 = scalar_lea.vmem [#allocation5], %s243
        %v245 = vld [vmem:[%s217] sm:$0xff]
        %v246 = vld [vmem:[%s217 + $0x8] sm:$0xff]
        %v247 = vld [vmem:[%s217 + $0x10] sm:$0xff]
        %v248 = vld [vmem:[%s217 + $0x18] sm:$0xff]
        %v249 = vld [vmem:[%s217 + $0x20] sm:$0xff]
        %v250 = vld [vmem:[%s217 + $0x28] sm:$0xff]
        %v251 = vld [vmem:[%s217 + $0x30] sm:$0xff]
        %v252 = vld [vmem:[%s217 + $0x38] sm:$0xff]
        %v253 = vadd.f32 %v245, %v246
        %254 = vadd.xlane.f32.xlu0 %v253
        %v255 = vpop.xlane.xlu0 %254
        %v256 = vadd.f32 %v247, %v248
        %257 = vadd.xlane.f32.xlu0 %v256
        %v258 = vpop.xlane.xlu0 %257
        %v259 = vadd.f32 %v249, %v250
        %260 = vadd.xlane.f32.xlu0 %v259
        %v261 = vpop.xlane.xlu0 %260
        %v262 = vadd.f32 %v251, %v252
        %263 = vadd.xlane.f32.xlu0 %v262
        %v264 = vpop.xlane.xlu0 %263
        %v265 = vld [vmem:[%s1] sm:$0x3]
        %v266 = vld [vmem:[%s2] sm:$0x3]
        %vm267 = vcmask 261120
        %v269 = vsel %vm267, %v265, 0
        %271 = vmatpush.msra.mxu0 0.0
        %272 = vmatpush.msra.mxu0 0.0
        %273 = vmatpush.msra.mxu0 0.0
        %274 = vmatpush.msra.mxu0 0.0
        %275 = vmatpush.msra.mxu0 0.0
        %276 = vmatpush.msra.mxu0 0.0
        %277 = vmatpush.msra.mxu0 0.0
        %278 = vmatpush.msra.mxu0 0.0
        %279 = vmatpush.msra.mxu0 0.0
        %280 = vmatpush.msra.mxu0 0.0
        %281 = vmatpush.msra.mxu0 0.0
        %282 = vmatpush.msra.mxu0 0.0
        %283 = vmatpush.msra.mxu0 %v264
        %284 = vmatpush.msra.mxu0 %v261
        %285 = vmatpush.msra.mxu0 %v258
        %286 = vmatpush.msra.mxu0 %v255
        %287 = vmatmul.f32.gmra.mxu0 %v269
        %v288 = vpop.f32.mrf.mxu0
        %v289 = vadd.f32 %v266, %v288
        %290 = vdwg.mxu0
        %v291 = vmax.f32 %v289, 0.0
        %v292 = vld [vmem:[%s3] sm:$0xff]
        %v293 = vld [vmem:[%s3 + $0x8] sm:$0xff]
        %v294 = vld [vmem:[%s3 + $0x10] sm:$0xff]
        %v295 = vld [vmem:[%s3 + $0x18] sm:$0xff]
        %v296 = vld [vmem:[%s4] sm:$0xff]
        %v297 = vld [vmem:[%s4 + $0x8] sm:$0xff]
        %v298 = vld [vmem:[%s4 + $0x10] sm:$0xff]
        %v299 = vld [vmem:[%s4 + $0x18] sm:$0xff]
        %vm300 = vcmask 15360
        %v302 = vsel %vm300, %v292, 0
        %v305 = vsel %vm300, %v293, 0
        %v308 = vsel %vm300, %v294, 0
        %v311 = vsel %vm300, %v295, 0
        %vm313 = vcmask 1041408
        %v315 = vsel %vm313, %v291, 0
        %317 = vmatpush.msra.mxu0 0.0
        %318 = vmatpush.msra.mxu0 0.0
        %319 = vmatpush.msra.mxu0 0.0
        %320 = vmatpush.msra.mxu0 0.0
        %321 = vmatpush.msra.mxu0 0.0
        %322 = vmatpush.msra.mxu0 0.0
        %323 = vmatpush.msra.mxu0 0.0
        %324 = vmatpush.msra.mxu0 0.0
        %325 = vmatpush.msra.mxu0 0.0
        %326 = vmatpush.msra.mxu0 0.0
        %327 = vmatpush.msra.mxu0 0.0
        %328 = vmatpush.msra.mxu0 0.0
        %329 = vmatpush.msra.mxu0 0.0
        %330 = vmatpush.msra.mxu0 0.0
        %331 = vmatpush.msra.mxu0 0.0
        %332 = vmatpush.msra.mxu0 %v315
        %333 = vmatmul.f32.gmra.mxu0 %v302
        %v334 = vpop.f32.mrf.mxu0
        %v335 = vadd.f32 %v296, %v334
        %336 = vmatmul.f32.gmra.mxu0 %v305
        %v337 = vpop.f32.mrf.mxu0
        %v338 = vadd.f32 %v297, %v337
        %339 = vmatmul.f32.gmra.mxu0 %v308
        %v340 = vpop.f32.mrf.mxu0
        %v341 = vadd.f32 %v298, %v340
        %342 = vmatmul.f32.gmra.mxu0 %v311
        %v343 = vpop.f32.mrf.mxu0
        %v344 = vadd.f32 %v299, %v343
        %345 = vdwg.mxu0
        %v346 = vsub.f32 0.0, %v335
        %v347 = vsub.f32 0.0, %v338
        %v348 = vsub.f32 0.0, %v341
        %v349 = vsub.f32 0.0, %v344
        %v350 = vmul.f32 %v346, 1.442695
        %v351 = vpow.pop %v350
        %v352 = vmul.f32 %v347, 1.442695
        %v353 = vpow.pop %v352
        %v354 = vmul.f32 %v348, 1.442695
        %v355 = vpow.pop %v354
        %v356 = vmul.f32 %v349, 1.442695
        %v357 = vpow.pop %v356
        %v358 = vadd.f32 %v351, 1.0
        %v359 = vadd.f32 %v353, 1.0
        %v360 = vadd.f32 %v355, 1.0
        %v361 = vadd.f32 %v357, 1.0
        %v362 = vrcp.pop %v358
        %v363 = vmul.f32 %v358, %v362
        %v364 = vsub.f32 1.0, %v363
        %v365 = vmul.f32 %v362, %v364
        %v366 = vadd.f32 %v362, %v365
        %vm367 = vweird.f32 %v358
        %vm368 = vweird.f32 %v362
        %vm369 = vmor %vm367, %vm368
        %v370 = vsel %vm369, %v362, %v366
        %v371 = vand.u32 2147483647, %v358
        %vm372 = vcmp.eq.f32.partialorder %v371, 8.507059e+37
        %v373 = vand.u32 %v358, 2147483648
        %v374 = vor.u32 1.1754944e-38, %v373
        %v375 = vsel %vm372, %v374, %v370
        %v376 = vmul.f32 1.0, %v375
        %v377 = vrcp.pop %v359
        %v378 = vmul.f32 %v359, %v377
        %v379 = vsub.f32 1.0, %v378
        %v380 = vmul.f32 %v377, %v379
        %v381 = vadd.f32 %v377, %v380
        %vm382 = vweird.f32 %v359
        %vm383 = vweird.f32 %v377
        %vm384 = vmor %vm382, %vm383
        %v385 = vsel %vm384, %v377, %v381
        %v386 = vand.u32 2147483647, %v359
        %vm387 = vcmp.eq.f32.partialorder %v386, 8.507059e+37
        %v388 = vand.u32 %v359, 2147483648
        %v389 = vor.u32 1.1754944e-38, %v388
        %v390 = vsel %vm387, %v389, %v385
        %v391 = vmul.f32 1.0, %v390
        %v392 = vrcp.pop %v360
        %v393 = vmul.f32 %v360, %v392
        %v394 = vsub.f32 1.0, %v393
        %v395 = vmul.f32 %v392, %v394
        %v396 = vadd.f32 %v392, %v395
        %vm397 = vweird.f32 %v360
        %vm398 = vweird.f32 %v392
        %vm399 = vmor %vm397, %vm398
        %v400 = vsel %vm399, %v392, %v396
        %v401 = vand.u32 2147483647, %v360
        %vm402 = vcmp.eq.f32.partialorder %v401, 8.507059e+37
        %v403 = vand.u32 %v360, 2147483648
        %v404 = vor.u32 1.1754944e-38, %v403
        %v405 = vsel %vm402, %v404, %v400
        %v406 = vmul.f32 1.0, %v405
        %v407 = vrcp.pop %v361
        %v408 = vmul.f32 %v361, %v407
        %v409 = vsub.f32 1.0, %v408
        %v410 = vmul.f32 %v407, %v409
        %v411 = vadd.f32 %v407, %v410
        %vm412 = vweird.f32 %v361
        %vm413 = vweird.f32 %v407
        %vm414 = vmor %vm412, %vm413
        %v415 = vsel %vm414, %v407, %v411
        %v416 = vand.u32 2147483647, %v361
        %vm417 = vcmp.eq.f32.partialorder %v416, 8.507059e+37
        %v418 = vand.u32 %v361, 2147483648
        %v419 = vor.u32 1.1754944e-38, %v418
        %v420 = vsel %vm417, %v419, %v415
        %v421 = vmul.f32 1.0, %v420
        %423 = vset.pattern.permute.xlu0 0
        %424 = vperm.xlu0 %423, %v376
        %v425 = vpop.permute.xlu0 %424
        %428 = vset.pattern.permute.xlu0 0
        %429 = vperm.xlu0 %428, %v391
        %v430 = vpop.permute.xlu0 %429
        %433 = vset.pattern.permute.xlu0 0
        %434 = vperm.xlu0 %433, %v406
        %v435 = vpop.permute.xlu0 %434
        %438 = vset.pattern.permute.xlu0 0
        %439 = vperm.xlu0 %438, %v421
        %v440 = vpop.permute.xlu0 %439
        %v442 = vmul.f32 %v245, %v425
        %v443 = vmul.f32 %v246, %v425
        %v444 = vmul.f32 %v247, %v430
        %v445 = vmul.f32 %v248, %v430
        %v446 = vmul.f32 %v249, %v435
        %v447 = vmul.f32 %v250, %v435
        %v448 = vmul.f32 %v251, %v440
        %v449 = vmul.f32 %v252, %v440
        %450 = vst [vmem:[%s244] sm:$0xff] %v442
        %451 = vst [vmem:[%s244 + $0x8] sm:$0xff] %v443
        %452 = vst [vmem:[%s244 + $0x10] sm:$0xff] %v444
        %453 = vst [vmem:[%s244 + $0x18] sm:$0xff] %v445
        %454 = vst [vmem:[%s244 + $0x20] sm:$0xff] %v446
        %455 = vst [vmem:[%s244 + $0x28] sm:$0xff] %v447
        %456 = vst [vmem:[%s244 + $0x30] sm:$0xff] %v448
        %457 = vst [vmem:[%s244 + $0x38] sm:$0xff] %v449
        %s458 = sand.u32 %s140, 1
        %s459 = scalar_lea.sflag [#allocation4], %s458
        %s460 = sand.u32 %s140, 1
        %s461 = smul.addr %s460, 64
        %s462 = scalar_lea.vmem [#allocation5], %s461
        // Predicated region
        $region45: #{tpu_custom_call.1} parent=39 // pred_check
          %p463 = pneg %p150
        $region46: #{tpu_custom_call.1} parent=39 // pred_check_branch
          %465 = sbr.rel (%p463) target = $region48
        $region47: #{tpu_custom_call.1} parent=39 // pred_region
          %467 = vsyncadd %s459, 0
          %s468 = smul.addr %s22, 8
          %s469 = smul.addr %s468, 8
          %s470 = scalar_lea.hbm %s5, %s469
          %s471 = sshll.u32 %s462, 4
          %s472 = int_to_ptr.vmem [resolvable:$true] %s471
          %s473 = sshll.u32 %s470, 4
          %s474 = int_to_ptr.hbm [resolvable:$true] %s473
          %479 = dma.vmem_to_hbm [thread:$0]  %s472, 1024, %s474, %s459, 256, 256, 16
        $region48: #{tpu_custom_call.1} parent=39 // pred_fallthru
          _
      $region40: #{tpu_custom_call.1} parent=5 // pred_fallthru
        _
      %p480 = scmp.le.s32.totalorder 2, %s17
      // Predicated region
      $region49: #{tpu_custom_call.1} parent=5 // pred_check
        %p481 = pneg %p480
      $region50: #{tpu_custom_call.1} parent=5 // pred_check_branch
        %483 = sbr.rel (%p481) target = $region52
      $region51: #{tpu_custom_call.1} parent=5 // pred_region
        %s484 = ssub.s32 %s17, 2
        // Predicated region
        $region53: #{tpu_custom_call.1} parent=51 // pred_check
          %p485 = pneg %p156
        $region54: #{tpu_custom_call.1} parent=51 // pred_check_branch
          %487 = sbr.rel (%p485) target = $region56
        $region55: #{tpu_custom_call.1} parent=51 // pred_region
          %s488 = sand.u32 %s141, 1
          %s489 = scalar_lea.sflag [#allocation4], %s488
          %s490 = sand.u32 %s141, 1
          %s491 = smul.addr %s490, 64
          %s492 = scalar_lea.vmem [#allocation5], %s491
          %494 = dma.done %s489, 1024
        $region56: #{tpu_custom_call.1} parent=51 // pred_fallthru
          _
      $region52: #{tpu_custom_call.1} parent=5 // pred_fallthru
        _
    $region6: #{tpu_custom_call.1} parent=1 // loop_footer
      %s21 = sadd.s32 1, %s17
    $region7: #{tpu_custom_call.1} parent=1 // loop_footer_branch
      %16 = sbr.rel target = $region3
    $region8: #{tpu_custom_call.1} parent=1 // loop_exit
      _
    %495 = vsyncpa [#allocation3], 1
    %s496 = scalar_lea.sflag [#allocation3], 1
    %497 = vsyncpa %s496, 1
    %498 = vsyncpa [#allocation4], 1
    %s499 = scalar_lea.sflag [#allocation4], 1
    %500 = vsyncpa %s499, 1

</llo_original>
